<compile_context>
chip_gen: v7x
topology: tpu7x:2x2x1
jax: 0.10.0
libtpu: 0.0.40
codegen_flags: <defaults>
</compile_context>

<pallas_src>
import jax
import jax.numpy as jnp
from jax.experimental import pallas as pl
from jax.experimental.pallas import tpu as pltpu


def _round_up(a, b):
    return ((a + b - 1) // b) * b


def _upsampler_kernel(x_ref, w_ref, o_ref):
    # x_ref: (tm, d_in_p)        lane-dense input tile
    # w_ref: (d_in_p, d_out_p)   block-diagonal W^T, VMEM-resident across steps
    # o_ref: (tm, d_out_p)       lane-dense output tile
    y = jnp.dot(x_ref[...], w_ref[...], preferred_element_type=jnp.float32)
    o_ref[...] = jnp.maximum(y, 0.0).astype(o_ref.dtype)


def upsampler_forward(x, weight, *, tm=8192):
    """relu(x @ weight.T); x: (..., d_in), weight: (d_out, d_in) torch layout."""
    d_out, d_in = weight.shape
    lead = x.shape[:-1]
    assert x.shape[-1] == d_in
    dtype = x.dtype
    isize = jnp.dtype(dtype).itemsize

    m = 1
    for s in lead:
        m *= s
    if m == 0:
        return jnp.zeros((*lead, d_out), dtype=dtype)
    x2d = x.reshape(m, d_in)

    # ---- lane-density row packing (only if it divides M: no pad, no slice) ----
    LANES = 128
    max_pack = LANES // d_in if (d_in < LANES and LANES % d_in == 0) else 1
    pack = max_pack
    while pack > 1 and m % pack != 0:
        pack //= 2                      # d_in | 128 => max_pack is a power of two
    d_in_p = d_in * pack
    d_out_p = d_out * pack
    mp = m // pack

    xp = x2d.reshape(mp, d_in_p)        # contiguous -> free metadata reshape

    # weight: torch (d_out, d_in) -> lane-dense block-diag W^T (trace-time const)
    wt = weight.T.astype(dtype)
    w_bd = jnp.kron(jnp.eye(pack, dtype=dtype), wt) if pack > 1 else wt

    # ---- row tile selection ----------------------------------------------------
    sub = max(8, 32 // isize)           # sublane pack: f32=8, bf16=16, int8=32
    tm_cap = max(sub, _round_up(tm, sub))
    # Keep each grid step >= ~6 MiB of HBM traffic so the ~0.35us fixed per-step
    # overhead stays small even at v7x's 3.2 TB/s, but aim for >=4 steps on
    # large M so double-buffering overlaps and both v7x cores stay busy.
    min_rows = pl.cdiv(6 << 20, (d_in_p + d_out_p) * isize)
    tm_eff = min(tm_cap, _round_up(max(min_rows, pl.cdiv(mp, 4)), sub))
    if tm_eff >= mp:
        tm_eff = mp                     # single full-extent block: no masking
    grid_m = pl.cdiv(mp, tm_eff)        # ragged tail handled as a partial block

    # Double-buffered x/out tiles + weight; raise scoped VMEM explicitly so the
    # big tile works on v5e's 16 MiB default while staying < v7x's 64 MiB/TC.
    blk_bytes = (tm_eff * d_in_p + tm_eff * d_out_p + d_in_p * d_out_p) * isize
    vmem_limit = int(min(max(2 * blk_bytes + (4 << 20), 16 << 20), 48 << 20))

    cost = pl.CostEstimate(
        flops=2 * m * d_in * d_out,
        transcendentals=0,
        bytes_accessed=(m * d_in + d_in_p * d_out_p + m * d_out) * isize,
    )

    out2d = pl.pallas_call(
        _upsampler_kernel,
        out_shape=jax.ShapeDtypeStruct((mp, d_out_p), dtype),
        grid_spec=pltpu.PrefetchScalarGridSpec(
            num_scalar_prefetch=0,
            grid=(grid_m,),
            in_specs=[
                pl.BlockSpec((tm_eff, d_in_p), lambda i: (i, 0)),
                pl.BlockSpec((d_in_p, d_out_p), lambda i: (0, 0)),  # VMEM-resident
            ],
            out_specs=pl.BlockSpec((tm_eff, d_out_p), lambda i: (i, 0)),
        ),
        compiler_params=pltpu.CompilerParams(
            dimension_semantics=("parallel",),
            vmem_limit_bytes=vmem_limit,
        ),
        cost_estimate=cost,
    )(xp, w_bd)

    # mp * d_out_p == m * d_out  ->  free contiguous reshape, no slice.
    return out2d.reshape(*lead, d_out)


if __name__ == "__main__":
    # Module config: c_in=64, reduction=2 -> Linear(32 -> 64, bias=False) + ReLU
    c_in, reduction = 64, 2
    d_in = c_in // reduction

    key = jax.random.PRNGKey(0)
    k_x, k_w, k_x2, k_x3 = jax.random.split(key, 4)
    # torch Linear layout: (out_features, in_features)
    weight = jax.random.normal(k_w, (c_in, d_in), dtype=jnp.float32) * 0.05

    def ref_fn(xv, wv):
        return jnp.maximum(
            jnp.einsum("...d,od->...o", xv.astype(jnp.float32), wv.astype(jnp.float32)), 0.0
        )

    # 1) Small input: batch=2, seq=8, features=d_in.
    x = jax.random.normal(k_x, (2, 8, d_in), dtype=jnp.float32)
    out = jax.block_until_ready(upsampler_forward(x, weight))
    assert out.shape == (2, 8, c_in)
    assert jnp.allclose(out, ref_fn(x, weight), atol=1e-5, rtol=1e-5)

    # 2) Ragged rows (M=2100, pack=4 divides M -> no pad/slice HBM copies).
    x2 = jax.random.normal(k_x2, (3, 700, d_in), dtype=jnp.float32)
    #    a) forced multi-step grid with a partial tail block (grid=5, last 13 rows)
    out2 = jax.block_until_ready(upsampler_forward(x2, weight, tm=128))
    assert out2.shape == (3, 700, c_in)
    assert jnp.allclose(out2, ref_fn(x2, weight), atol=1e-5, rtol=1e-5)
    #    b) default big-tile path (single full-extent block)
    out2b = jax.block_until_ready(upsampler_forward(x2, weight))
    assert jnp.allclose(out2b, ref_fn(x2, weight), atol=1e-5, rtol=1e-5)

    # 3) M=7 not divisible by the lane pack -> pack=1 fallback, still no pad/slice.
    x3 = jax.random.normal(k_x3, (1, 7, d_in), dtype=jnp.float32)
    out3 = jax.block_until_ready(upsampler_forward(x3, weight))
    assert out3.shape == (1, 7, c_in)
    assert jnp.allclose(out3, ref_fn(x3, weight), atol=1e-5, rtol=1e-5)

    # 4) bf16 activations: half the HBM bytes; f32 accumulation inside the kernel.
    xb = x2.astype(jnp.bfloat16)
    outb = jax.block_until_ready(upsampler_forward(xb, weight))
    refb = jnp.maximum(
        jnp.einsum(
            "bsd,od->bso",
            xb.astype(jnp.float32),
            weight.astype(jnp.bfloat16).astype(jnp.float32),
        ),
        0.0,
    )
    assert outb.dtype == jnp.bfloat16
    assert jnp.allclose(outb.astype(jnp.float32), refb, atol=2e-2, rtol=2e-2)

    print("KERNEL_OK")
</pallas_src>

<mosaic_0001>
module attributes {stable_mosaic.version = 11 : i64} {
  func.func @_upsampler_kernel(%arg0: i32, %arg1: memref<4x128xf32, #tpu.memory_space<vmem>>, %arg2: memref<128x256xf32, #tpu.memory_space<vmem>>, %arg3: memref<4x256xf32, #tpu.memory_space<vmem>>) attributes {dimension_semantics = [#tpu.dimension_semantics<parallel>], iteration_bounds = array<i64: 1>, scalar_prefetch = 0 : i64, scratch_operands = 0 : i64, tpu.core_type = #tpu.core_type<tc>, window_params = [{transform_indices = @transform_0, window_bounds = array<i64: 4, 128>}, {pipeline_mode = #tpu.pipeline_mode<synchronous>, transform_indices = @transform_1, window_bounds = array<i64: 128, 256>}, {transform_indices = @transform_2, window_bounds = array<i64: 4, 256>}]} {
    %c0 = arith.constant 0 : index
    %c0_0 = arith.constant 0 : index
    %0 = vector.load %arg1[%c0, %c0_0] : memref<4x128xf32, #tpu.memory_space<vmem>>, vector<4x128xf32>
    %c0_1 = arith.constant 0 : index
    %c0_2 = arith.constant 0 : index
    %1 = vector.load %arg2[%c0_1, %c0_2] : memref<128x256xf32, #tpu.memory_space<vmem>>, vector<128x256xf32>
    %cst = arith.constant dense<0.000000e+00> : vector<4x256xf32>
    %2 = tpu.matmul %0, %1, %cst {dimension_numbers = #tpu.dot_dimension_numbers<[1], [0], [0], [1], [0, 0, 1, 1], [], []>} : vector<4x128xf32>, vector<128x256xf32>, vector<4x256xf32> -> vector<4x256xf32>
    %cst_3 = arith.constant 0.000000e+00 : f32
    %3 = vector.broadcast %cst_3 : f32 to vector<4x256xf32>
    %4 = arith.maximumf %2, %3 : vector<4x256xf32>
    %c0_4 = arith.constant 0 : index
    %c0_5 = arith.constant 0 : index
    %5 = vector.load %arg3[%c0_4, %c0_5] : memref<4x256xf32, #tpu.memory_space<vmem>>, vector<4x256xf32>
    tpu.vector_store %arg3[%c0_4, %c0_5], %4 {strides = array<i32>} : memref<4x256xf32, #tpu.memory_space<vmem>>, vector<4x256xf32>,
    return
  }
  func.func @transform_0(%arg0: i32) -> (i32, i32) {
    %c0_i32 = arith.constant 0 : i32
    %c0_i32_0 = arith.constant 0 : i32
    return %arg0, %c0_i32 : i32, i32
  }
  func.func @transform_1(%arg0: i32) -> (i32, i32) {
    %c0_i32 = arith.constant 0 : i32
    %c0_i32_0 = arith.constant 0 : i32
    %c0_i32_1 = arith.constant 0 : i32
    return %c0_i32, %c0_i32_0 : i32, i32
  }
  func.func @transform_2(%arg0: i32) -> (i32, i32) {
    %c0_i32 = arith.constant 0 : i32
    %c0_i32_0 = arith.constant 0 : i32
    return %arg0, %c0_i32 : i32, i32
  }
}

</mosaic_0001>

<llo_original>
// kernel: tpu_custom_call.1
$region0: #{tpu_custom_call.1}
  #allocation0 [shape = 'u32[]', space=smem, size = 0x4, offset = 0x4, fixed_abs, tag = 'smem constant byte address 0x4 - core index']
  #allocation1 [shape = 'u32[144,128]{1,0:T(1,128)}', space=vmem, size = 0x12000, scoped, tag = 'internal scratch']
  %s0 = inlined_call_operand.hbm [shape: f32[4,128], index: 0, kind: input, shape index: {}]
  %s1 = inlined_call_operand.hbm [shape: f32[128,256], index: 1, kind: input, shape index: {}]
  %s2 = inlined_call_operand.hbm [shape: f32[4,256], index: 2, kind: output, shape index: {}]
  %s3 = sld [smem:[#allocation0]]
  $region26: #{tpu_custom_call.1} parent=0
    _
  %s5 = ssub.s32 1, %s3
  %s6 = scalar_select 0, %s5, %s3
  $region1: #{tpu_custom_call.1} parent=0
    #allocation2 [shape = 'u8[2048]{0}', space=vmem, size = 0x800, scoped, tag = 'input window, operand 0, single buffered']
    #allocation3 [shape = 's32[1]{0}', space=sflag, size = 0x4, scoped, tag = 'scoped memory for tpu_custom_call.1']
    #allocation4 [shape = 's32[1]{0}', space=sflag, size = 0x4, scoped, tag = 'scoped memory for tpu_custom_call.1']
    #allocation5 [shape = 'u8[131072]{0}', space=vmem, size = 0x20000, scoped, tag = 'input window, operand 1, single buffered']
    #allocation6 [shape = 's32[1]{0}', space=sflag, size = 0x4, scoped, tag = 'scoped memory for tpu_custom_call.1']
    #allocation7 [shape = 'u8[4096]{0}', space=vmem, size = 0x1000, scoped, tag = 'output window, operand 0, single buffered']
    %7 = vsyncpa [#allocation3], 0
    %8 = vsyncpa [#allocation6], 0
    %9 = vsyncpa [#allocation4], 0
    // Predicated region
    $region2: #{tpu_custom_call.1} parent=1 // pred_check
      _
    $region3: #{tpu_custom_call.1} parent=1 // pred_check_branch
      %11 = sbr.rel (0) target = $region5
    $region4: #{tpu_custom_call.1} parent=1 // pred_region
      %s13 = ssub.s32 64, 64
      %14 = vsyncadd [#allocation3], %s13
      %s16 = sshll.u32 [#allocation2], 4
      %s17 = int_to_ptr.vmem [resolvable:$true] %s16
      %19 = dma.hbm_to_vmem [thread:$0]  %s0, 64, %s17, [#allocation3]
    $region5: #{tpu_custom_call.1} parent=1 // pred_fallthru
      _
    // Predicated region
    $region6: #{tpu_custom_call.1} parent=1 // pred_check
      _
    $region7: #{tpu_custom_call.1} parent=1 // pred_check_branch
      %21 = sbr.rel (0) target = $region9
    $region8: #{tpu_custom_call.1} parent=1 // pred_region
      %s23 = ssub.s32 4096, 4096
      %24 = vsyncadd [#allocation6], %s23
      %s25 = sshll.u32 [#allocation5], 4
      %s26 = int_to_ptr.vmem [resolvable:$true] %s25
      %31 = dma.hbm_to_vmem [thread:$0]  %s1, 4096, %s26, [#allocation6], 256, 256, 16
    $region9: #{tpu_custom_call.1} parent=1 // pred_fallthru
      _
    // Predicated region
    $region10: #{tpu_custom_call.1} parent=1 // pred_check
      _
    $region11: #{tpu_custom_call.1} parent=1 // pred_check_branch
      %33 = sbr.rel (0) target = $region13
    $region12: #{tpu_custom_call.1} parent=1 // pred_region
      %34 = dma.done [#allocation3], 64
    $region13: #{tpu_custom_call.1} parent=1 // pred_fallthru
      _
    // Predicated region
    $region14: #{tpu_custom_call.1} parent=1 // pred_check
      _
    $region15: #{tpu_custom_call.1} parent=1 // pred_check_branch
      %36 = sbr.rel (0) target = $region17
    $region16: #{tpu_custom_call.1} parent=1 // pred_region
      %37 = dma.done [#allocation6], 4096
    $region17: #{tpu_custom_call.1} parent=1 // pred_fallthru
      _
    %v38 = vld [vmem:[#allocation2] sm:$0xf]
    %v39 = vld [vmem:[#allocation5] sm:$0xff]
    %v40 = vld [vmem:[#allocation5 + $0x8] sm:$0xff]
    %v41 = vld [vmem:[#allocation5 + $0x10] sm:$0xff]
    %v42 = vld [vmem:[#allocation5 + $0x18] sm:$0xff]
    %v43 = vld [vmem:[#allocation5 + $0x20] sm:$0xff]
    %v44 = vld [vmem:[#allocation5 + $0x28] sm:$0xff]
    %v45 = vld [vmem:[#allocation5 + $0x30] sm:$0xff]
    %v46 = vld [vmem:[#allocation5 + $0x38] sm:$0xff]
    %v47 = vld [vmem:[#allocation5 + $0x40] sm:$0xff]
    %v48 = vld [vmem:[#allocation5 + $0x48] sm:$0xff]
    %v49 = vld [vmem:[#allocation5 + $0x50] sm:$0xff]
    %v50 = vld [vmem:[#allocation5 + $0x58] sm:$0xff]
    %v51 = vld [vmem:[#allocation5 + $0x60] sm:$0xff]
    %v52 = vld [vmem:[#allocation5 + $0x68] sm:$0xff]
    %v53 = vld [vmem:[#allocation5 + $0x70] sm:$0xff]
    %v54 = vld [vmem:[#allocation5 + $0x78] sm:$0xff]
    %v55 = vld [vmem:[#allocation5 + $0x80] sm:$0xff]
    %v56 = vld [vmem:[#allocation5 + $0x88] sm:$0xff]
    %v57 = vld [vmem:[#allocation5 + $0x90] sm:$0xff]
    %v58 = vld [vmem:[#allocation5 + $0x98] sm:$0xff]
    %v59 = vld [vmem:[#allocation5 + $0xa0] sm:$0xff]
    %v60 = vld [vmem:[#allocation5 + $0xa8] sm:$0xff]
    %v61 = vld [vmem:[#allocation5 + $0xb0] sm:$0xff]
    %v62 = vld [vmem:[#allocation5 + $0xb8] sm:$0xff]
    %v63 = vld [vmem:[#allocation5 + $0xc0] sm:$0xff]
    %v64 = vld [vmem:[#allocation5 + $0xc8] sm:$0xff]
    %v65 = vld [vmem:[#allocation5 + $0xd0] sm:$0xff]
    %v66 = vld [vmem:[#allocation5 + $0xd8] sm:$0xff]
    %v67 = vld [vmem:[#allocation5 + $0xe0] sm:$0xff]
    %v68 = vld [vmem:[#allocation5 + $0xe8] sm:$0xff]
    %v69 = vld [vmem:[#allocation5 + $0xf0] sm:$0xff]
    %v70 = vld [vmem:[#allocation5 + $0xf8] sm:$0xff]
    %71 = vmatprep.subr.mxu0 %v40
    %72 = vmatpush1.msra.mxu0 %v39
    %73 = vmatprep.subr.mxu0 %v42
    %74 = vmatpush1.msra.mxu0 %v41
    %75 = vmatprep.subr.mxu0 %v44
    %76 = vmatpush1.msra.mxu0 %v43
    %77 = vmatprep.subr.mxu0 %v46
    %78 = vmatpush1.msra.mxu0 %v45
    %79 = vmatprep.subr.mxu0 %v48
    %80 = vmatpush1.msra.mxu0 %v47
    %81 = vmatprep.subr.mxu0 %v50
    %82 = vmatpush1.msra.mxu0 %v49
    %83 = vmatprep.subr.mxu0 %v52
    %84 = vmatpush1.msra.mxu0 %v51
    %85 = vmatprep.subr.mxu0 %v54
    %86 = vmatpush1.msra.mxu0 %v53
    %87 = vmatprep.subr.mxu0 %v56
    %88 = vmatpush1.msra.mxu0 %v55
    %89 = vmatprep.subr.mxu0 %v58
    %90 = vmatpush1.msra.mxu0 %v57
    %91 = vmatprep.subr.mxu0 %v60
    %92 = vmatpush1.msra.mxu0 %v59
    %93 = vmatprep.subr.mxu0 %v62
    %94 = vmatpush1.msra.mxu0 %v61
    %95 = vmatprep.subr.mxu0 %v64
    %96 = vmatpush1.msra.mxu0 %v63
    %97 = vmatprep.subr.mxu0 %v66
    %98 = vmatpush1.msra.mxu0 %v65
    %99 = vmatprep.subr.mxu0 %v68
    %100 = vmatpush1.msra.mxu0 %v67
    %101 = vmatprep.subr.mxu0 %v70
    %102 = vmatpush1.msra.mxu0 %v69
    %103 = vmatprep.subr.mxu0 0.0
    %104 = vmatpush1.msra.mxu0 0.0
    %105 = vmatprep.subr.mxu0 0.0
    %106 = vmatpush1.msra.mxu0 0.0
    %107 = vmatprep.subr.mxu0 0.0
    %108 = vmatpush1.msra.mxu0 0.0
    %109 = vmatprep.subr.mxu0 0.0
    %110 = vmatpush1.msra.mxu0 0.0
    %111 = vmatprep.subr.mxu0 0.0
    %112 = vmatpush1.msra.mxu0 0.0
    %113 = vmatprep.subr.mxu0 0.0
    %114 = vmatpush1.msra.mxu0 0.0
    %115 = vmatprep.subr.mxu0 0.0
    %116 = vmatpush1.msra.mxu0 0.0
    %117 = vmatprep.subr.mxu0 0.0
    %118 = vmatpush1.msra.mxu0 0.0
    %119 = vmatprep.subr.mxu0 0.0
    %120 = vmatpush1.msra.mxu0 0.0
    %121 = vmatprep.subr.mxu0 0.0
    %122 = vmatpush1.msra.mxu0 0.0
    %123 = vmatprep.subr.mxu0 0.0
    %124 = vmatpush1.msra.mxu0 0.0
    %125 = vmatprep.subr.mxu0 0.0
    %126 = vmatpush1.msra.mxu0 0.0
    %127 = vmatprep.subr.mxu0 0.0
    %128 = vmatpush1.msra.mxu0 0.0
    %129 = vmatprep.subr.mxu0 0.0
    %130 = vmatpush1.msra.mxu0 0.0
    %131 = vmatprep.subr.mxu0 0.0
    %132 = vmatpush1.msra.mxu0 0.0
    %133 = vmatprep.subr.mxu0 0.0
    %134 = vmatpush1.msra.mxu0 0.0
    %135 = vmatprep.mubr.f32.mxu0 0.0
    %136 = vmatmul.mubr.f32.gmra.mrb[0].mxu0 %v38
    %v137 = vpop.f32.mrb[0].mxu0
    %v138 = vadd.f32 0.0, %v137
    %v139 = vpop.f32.mrb[0].mxu0
    %v140 = vadd.f32 0.0, %v139
    %141 = vdwg.mxu0
    %v142 = vmax.f32 %v138, 0.0
    %v143 = vmax.f32 %v140, 0.0
    %v146 = vcombine.low %v142, %v143
    %148 = vst [vmem:[#allocation7] sm:$0xff] %v146
    // Predicated region
    $region18: #{tpu_custom_call.1} parent=1 // pred_check
      _
    $region19: #{tpu_custom_call.1} parent=1 // pred_check_branch
      %150 = sbr.rel (0) target = $region21
    $region20: #{tpu_custom_call.1} parent=1 // pred_region
      %s152 = ssub.s32 128, 128
      %153 = vsyncadd [#allocation4], %s152
      %s155 = sshll.u32 [#allocation7], 4
      %s156 = int_to_ptr.vmem [resolvable:$true] %s155
      %158 = dma.vmem_to_hbm [thread:$0]  %s156, 128, %s2, [#allocation4]
    $region21: #{tpu_custom_call.1} parent=1 // pred_fallthru
      _
    // Predicated region
    $region22: #{tpu_custom_call.1} parent=1 // pred_check
      _
    $region23: #{tpu_custom_call.1} parent=1 // pred_check_branch
      %160 = sbr.rel (0) target = $region25
    $region24: #{tpu_custom_call.1} parent=1 // pred_region
      %161 = dma.done [#allocation4], 128
    $region25: #{tpu_custom_call.1} parent=1 // pred_fallthru
      _
    %162 = vsyncpa [#allocation3], 1
    %163 = vsyncpa [#allocation6], 1
    %164 = vsyncpa [#allocation4], 1

</llo_original>
